<compile_context>
chip_gen: v7x
topology: tpu7x:2x2x1
jax: 0.10.0
libtpu: 0.0.40
codegen_flags: <defaults>
</compile_context>

<pallas_src>
import functools

import jax
import jax.numpy as jnp
from jax.experimental import pallas as pl
from jax.experimental.pallas import tpu as pltpu


def _round_up(x, m):
    return ((x + m - 1) // m) * m


def _modality_kernel(x_ref, w_ref, b_ref, out_ref, *, n_modality, code):
    # x_ref: (TB, 64)  w_ref: (64, N_PAD)  b_ref: (1, N_PAD)  out_ref: (TB, N_PAD)
    x = x_ref[...].astype(jnp.float32)
    w = w_ref[...].astype(jnp.float32)
    b = b_ref[...].astype(jnp.float32)

    # Single fused matmul for both heads (MXU), f32 accumulation.
    z = jnp.dot(x, w, preferred_element_type=jnp.float32) + b   # (TB, N_PAD)

    col = jax.lax.broadcasted_iota(jnp.int32, z.shape, 1)
    mask_c = col < n_modality                                    # classifier cols
    mask_h = (col >= n_modality) & (col < n_modality + code)     # tanh cols

    # ---- head 1: log-softmax over the first n_modality columns ----
    neg_inf = jnp.float32(-jnp.inf)
    z_c = jnp.where(mask_c, z, neg_inf)
    z_max = jnp.max(z_c, axis=-1, keepdims=True)
    sum_exp = jnp.sum(
        jnp.where(mask_c, jnp.exp(z - z_max), jnp.float32(0.0)),
        axis=-1, keepdims=True)
    log_sm = z - z_max - jnp.log(sum_exp)

    # ---- head 2: tanh over the code columns ----
    th = jnp.tanh(z)

    out = jnp.where(mask_c, log_sm,
                    jnp.where(mask_h, th, jnp.float32(0.0)))
    out_ref[...] = out.astype(out_ref.dtype)                     # lane-dense store


def modality_forward(x, w1, b1, w2, b2, *, tile_b=1024):
    """x: (B, 64); w1: (64, nModality); b1: (1, nModality) or (nModality,);
    w2: (64, code); b2: (1, code) or (code,). Returns (x_c, x_h) in f32."""
    B, F = x.shape
    n_modality = w1.shape[1]
    code = w2.shape[1]
    n_fused = n_modality + code
    n_pad = _round_up(max(n_fused, 128), 128)    # lane-dense fused output width

    # Pack the two heads into one lane-padded weight / bias slab (wrapper-side,
    # pure layout plumbing).
    w = jnp.zeros((F, n_pad), jnp.float32)
    w = w.at[:, :n_modality].set(w1.astype(jnp.float32))
    w = w.at[:, n_modality:n_fused].set(w2.astype(jnp.float32))
    b = jnp.zeros((1, n_pad), jnp.float32)
    b = b.at[:, :n_modality].set(jnp.reshape(b1, (1, n_modality)).astype(jnp.float32))
    b = b.at[:, n_modality:n_fused].set(jnp.reshape(b2, (1, code)).astype(jnp.float32))

    # Batch tiling: TB rows per grid step (multiple of 8 sublanes), padded batch.
    tb = min(tile_b, _round_up(B, 8))
    tb = _round_up(tb, 8)
    b_pad = _round_up(B, tb)
    x_p = jnp.pad(x, ((0, b_pad - B), (0, 0))) if b_pad != B else x

    grid = (b_pad // tb,)
    kernel = functools.partial(_modality_kernel, n_modality=n_modality, code=code)

    out = pl.pallas_call(
        kernel,
        out_shape=jax.ShapeDtypeStruct((b_pad, n_pad), jnp.float32),
        grid=grid,
        in_specs=[
            pl.BlockSpec((tb, F), lambda i: (i, 0)),        # streamed activations
            pl.BlockSpec((F, n_pad), lambda i: (0, 0)),     # resident fused weights
            pl.BlockSpec((1, n_pad), lambda i: (0, 0)),     # resident fused bias
        ],
        out_specs=pl.BlockSpec((tb, n_pad), lambda i: (i, 0)),
        compiler_params=pltpu.CompilerParams(
            dimension_semantics=("parallel",),
        ),
    )(x_p, w, b)

    x_c = out[:B, :n_modality]
    x_h = out[:B, n_modality:n_fused]
    return x_c, x_h


def init_params(key, n_modality, code, in_features=64):
    # Deterministic init mimicking torch.nn.Linear default:
    # U(-1/sqrt(fan_in), 1/sqrt(fan_in)) for both weight and bias.
    k1, k2, k3, k4 = jax.random.split(key, 4)
    bound = 1.0 / jnp.sqrt(in_features)
    w1 = jax.random.uniform(k1, (in_features, n_modality), jnp.float32, -bound, bound)
    b1 = jax.random.uniform(k2, (1, n_modality), jnp.float32, -bound, bound)
    w2 = jax.random.uniform(k3, (in_features, code), jnp.float32, -bound, bound)
    b2 = jax.random.uniform(k4, (1, code), jnp.float32, -bound, bound)
    return w1, b1, w2, b2


if __name__ == "__main__":
    B = 8
    N_MODALITY = 4
    CODE = 32

    key = jax.random.PRNGKey(0)
    kx, kp = jax.random.split(key)
    x = jax.random.normal(kx, (B, 64), jnp.float32)
    w1, b1, w2, b2 = init_params(kp, N_MODALITY, CODE)

    x_c, x_h = modality_forward(x, w1, b1, w2, b2)
    jax.block_until_ready((x_c, x_h))

    # Reference check against plain JAX.
    z1 = x @ w1 + b1
    ref_xc = jax.nn.log_softmax(z1, axis=1)
    ref_xh = jnp.tanh(x @ w2 + b2)
    assert x_c.shape == (B, N_MODALITY) and x_h.shape == (B, CODE)
    assert jnp.allclose(x_c, ref_xc, atol=1e-5), "log-softmax head mismatch"
    assert jnp.allclose(x_h, ref_xh, atol=1e-5), "tanh head mismatch"

    print("KERNEL_OK")
</pallas_src>

<mosaic_0001>
module attributes {stable_mosaic.version = 11 : i64} {
  func.func @_modality_kernel(%arg0: i32, %arg1: memref<8x64xf32, #tpu.memory_space<vmem>>, %arg2: memref<64x128xf32, #tpu.memory_space<vmem>>, %arg3: memref<1x128xf32, #tpu.memory_space<vmem>>, %arg4: memref<8x128xf32, #tpu.memory_space<vmem>>) attributes {dimension_semantics = [#tpu.dimension_semantics<parallel>], iteration_bounds = array<i64: 1>, scalar_prefetch = 0 : i64, scratch_operands = 0 : i64, tpu.core_type = #tpu.core_type<tc>, window_params = [{transform_indices = @transform_0, window_bounds = array<i64: 8, 64>}, {pipeline_mode = #tpu.pipeline_mode<synchronous>, transform_indices = @transform_1, window_bounds = array<i64: 64, 128>}, {pipeline_mode = #tpu.pipeline_mode<synchronous>, transform_indices = @transform_2, window_bounds = array<i64: 1, 128>}, {transform_indices = @transform_3, window_bounds = array<i64: 8, 128>}]} {
    %c0 = arith.constant 0 : index
    %c0_0 = arith.constant 0 : index
    %0 = vector.load %arg1[%c0, %c0_0] : memref<8x64xf32, #tpu.memory_space<vmem>>, vector<8x64xf32>
    %c0_1 = arith.constant 0 : index
    %c0_2 = arith.constant 0 : index
    %1 = vector.load %arg2[%c0_1, %c0_2] : memref<64x128xf32, #tpu.memory_space<vmem>>, vector<64x128xf32>
    %c0_3 = arith.constant 0 : index
    %c0_4 = arith.constant 0 : index
    %2 = vector.load %arg3[%c0_3, %c0_4] : memref<1x128xf32, #tpu.memory_space<vmem>>, vector<1x128xf32>
    %cst = arith.constant dense<0.000000e+00> : vector<8x128xf32>
    %3 = tpu.matmul %0, %1, %cst {dimension_numbers = #tpu.dot_dimension_numbers<[1], [0], [0], [1], [0, 0, 1, 1], [], []>} : vector<8x64xf32>, vector<64x128xf32>, vector<8x128xf32> -> vector<8x128xf32>
    %4 = vector.broadcast %2 : vector<1x128xf32> to vector<8x128xf32>
    %5 = arith.addf %3, %4 : vector<8x128xf32>
    %6 = tpu.iota {dimensions = array<i32: 1>} : vector<8x128xi32>
    %c4_i32 = arith.constant 4 : i32
    %7 = vector.broadcast %c4_i32 : i32 to vector<8x128xi32>
    %8 = arith.cmpi slt, %6, %7 : vector<8x128xi32>
    %c4_i32_5 = arith.constant 4 : i32
    %9 = vector.broadcast %c4_i32_5 : i32 to vector<8x128xi32>
    %10 = arith.cmpi sge, %6, %9 : vector<8x128xi32>
    %c36_i32 = arith.constant 36 : i32
    %11 = vector.broadcast %c36_i32 : i32 to vector<8x128xi32>
    %12 = arith.cmpi slt, %6, %11 : vector<8x128xi32>
    %13 = arith.andi %10, %12 : vector<8x128xi1>
    %cst_6 = arith.constant 0xFF800000 : f32
    %14 = vector.broadcast %cst_6 : f32 to vector<8x128xf32>
    %15 = arith.select %8, %5, %14 : vector<8x128xi1>, vector<8x128xf32>
    %cst_7 = arith.constant dense<0xFF800000> : vector<8xf32>
    %16 = vector.multi_reduction <maximumf>, %15, %cst_7 [1] : vector<8x128xf32> to vector<8xf32>
    %17 = vector.shape_cast %16 : vector<8xf32> to vector<8x1xf32>
    %18 = vector.broadcast %17 : vector<8x1xf32> to vector<8x128xf32>
    %19 = arith.subf %5, %18 : vector<8x128xf32>
    %20 = math.exp %19 : vector<8x128xf32>
    %cst_8 = arith.constant 0.000000e+00 : f32
    %21 = vector.broadcast %cst_8 : f32 to vector<8x128xf32>
    %22 = arith.select %8, %20, %21 : vector<8x128xi1>, vector<8x128xf32>
    %cst_9 = arith.constant dense<0.000000e+00> : vector<8xf32>
    %23 = vector.multi_reduction <add>, %22, %cst_9 [1] : vector<8x128xf32> to vector<8xf32>
    %24 = vector.shape_cast %23 : vector<8xf32> to vector<8x1xf32>
    %25 = vector.broadcast %17 : vector<8x1xf32> to vector<8x128xf32>
    %26 = arith.subf %5, %25 : vector<8x128xf32>
    %27 = math.log %24 : vector<8x1xf32>
    %28 = vector.broadcast %27 : vector<8x1xf32> to vector<8x128xf32>
    %29 = arith.subf %26, %28 : vector<8x128xf32>
    %30 = math.tanh %5 : vector<8x128xf32>
    %cst_10 = arith.constant 0.000000e+00 : f32
    %31 = vector.broadcast %cst_10 : f32 to vector<8x128xf32>
    %32 = arith.select %13, %30, %31 : vector<8x128xi1>, vector<8x128xf32>
    %33 = arith.select %8, %29, %32 : vector<8x128xi1>, vector<8x128xf32>
    %c0_11 = arith.constant 0 : index
    %c0_12 = arith.constant 0 : index
    %34 = vector.load %arg4[%c0_11, %c0_12] : memref<8x128xf32, #tpu.memory_space<vmem>>, vector<8x128xf32>
    tpu.vector_store %arg4[%c0_11, %c0_12], %33 {strides = array<i32>} : memref<8x128xf32, #tpu.memory_space<vmem>>, vector<8x128xf32>,
    return
  }
  func.func @transform_0(%arg0: i32) -> (i32, i32) {
    %c0_i32 = arith.constant 0 : i32
    %c0_i32_0 = arith.constant 0 : i32
    return %arg0, %c0_i32 : i32, i32
  }
  func.func @transform_1(%arg0: i32) -> (i32, i32) {
    %c0_i32 = arith.constant 0 : i32
    %c0_i32_0 = arith.constant 0 : i32
    %c0_i32_1 = arith.constant 0 : i32
    return %c0_i32, %c0_i32_0 : i32, i32
  }
  func.func @transform_2(%arg0: i32) -> (i32, i32) {
    %c0_i32 = arith.constant 0 : i32
    %c0_i32_0 = arith.constant 0 : i32
    %c0_i32_1 = arith.constant 0 : i32
    return %c0_i32, %c0_i32_0 : i32, i32
  }
  func.func @transform_3(%arg0: i32) -> (i32, i32) {
    %c0_i32 = arith.constant 0 : i32
    %c0_i32_0 = arith.constant 0 : i32
    return %arg0, %c0_i32 : i32, i32
  }
}

</mosaic_0001>

<llo_original>
// kernel: tpu_custom_call.1
$region0: #{tpu_custom_call.1}
  #allocation0 [shape = 'u32[]', space=smem, size = 0x4, offset = 0x4, fixed_abs, tag = 'smem constant byte address 0x4 - core index']
  #allocation1 [shape = 'u32[144,128]{1,0:T(1,128)}', space=vmem, size = 0x12000, scoped, tag = 'internal scratch']
  %s0 = inlined_call_operand.hbm [shape: f32[8,64], index: 0, kind: input, shape index: {}]
  %s1 = inlined_call_operand.hbm [shape: f32[64,128], index: 1, kind: input, shape index: {}]
  %s2 = inlined_call_operand.vmem [shape: f32[1,128], index: 2, kind: input, shape index: {}]
  %s3 = inlined_call_operand.hbm [shape: f32[8,128], index: 3, kind: output, shape index: {}]
  %s4 = sld [smem:[#allocation0]]
  $region30: #{tpu_custom_call.1} parent=0
    _
  %s6 = ssub.s32 1, %s4
  %s7 = scalar_select 0, %s6, %s4
  $region1: #{tpu_custom_call.1} parent=0
    #allocation2 [shape = 'u8[4096]{0}', space=vmem, size = 0x1000, scoped, tag = 'input window, operand 0, single buffered']
    #allocation3 [shape = 's32[1]{0}', space=sflag, size = 0x4, scoped, tag = 'scoped memory for tpu_custom_call.1']
    #allocation4 [shape = 's32[1]{0}', space=sflag, size = 0x4, scoped, tag = 'scoped memory for tpu_custom_call.1']
    #allocation5 [shape = 'u8[32768]{0}', space=vmem, size = 0x8000, scoped, tag = 'input window, operand 1, single buffered']
    #allocation6 [shape = 's32[1]{0}', space=sflag, size = 0x4, scoped, tag = 'scoped memory for tpu_custom_call.1']
    #allocation7 [shape = 'u8[4096]{0}', space=vmem, size = 0x1000, scoped, tag = 'output window, operand 0, single buffered']
    %8 = vsyncpa [#allocation3], 0
    %9 = vsyncpa [#allocation6], 0
    %10 = vsyncpa [#allocation4], 0
    // Predicated region
    $region2: #{tpu_custom_call.1} parent=1 // pred_check
      _
    $region3: #{tpu_custom_call.1} parent=1 // pred_check_branch
      %12 = sbr.rel (0) target = $region5
    $region4: #{tpu_custom_call.1} parent=1 // pred_region
      %s14 = ssub.s32 128, 128
      %15 = vsyncadd [#allocation3], %s14
      %s17 = sshll.u32 [#allocation2], 4
      %s18 = int_to_ptr.vmem [resolvable:$true] %s17
      %20 = dma.hbm_to_vmem [thread:$0]  %s0, 128, %s18, [#allocation3]
    $region5: #{tpu_custom_call.1} parent=1 // pred_fallthru
      _
    // Predicated region
    $region6: #{tpu_custom_call.1} parent=1 // pred_check
      _
    $region7: #{tpu_custom_call.1} parent=1 // pred_check_branch
      %22 = sbr.rel (0) target = $region9
    $region8: #{tpu_custom_call.1} parent=1 // pred_region
      %s24 = ssub.s32 1024, 1024
      %25 = vsyncadd [#allocation6], %s24
      %s26 = sshll.u32 [#allocation5], 4
      %s27 = int_to_ptr.vmem [resolvable:$true] %s26
      %32 = dma.hbm_to_vmem [thread:$0]  %s1, 1024, %s27, [#allocation6], 128, 128, 8
    $region9: #{tpu_custom_call.1} parent=1 // pred_fallthru
      _
    // Predicated region
    $region10: #{tpu_custom_call.1} parent=1 // pred_check
      _
    $region11: #{tpu_custom_call.1} parent=1 // pred_check_branch
      %34 = sbr.rel (0) target = $region13
    $region12: #{tpu_custom_call.1} parent=1 // pred_region
      _
    $region13: #{tpu_custom_call.1} parent=1 // pred_fallthru
      _
    // Predicated region
    $region14: #{tpu_custom_call.1} parent=1 // pred_check
      _
    $region15: #{tpu_custom_call.1} parent=1 // pred_check_branch
      %36 = sbr.rel (0) target = $region17
    $region16: #{tpu_custom_call.1} parent=1 // pred_region
      %37 = dma.done [#allocation3], 128
    $region17: #{tpu_custom_call.1} parent=1 // pred_fallthru
      _
    // Predicated region
    $region18: #{tpu_custom_call.1} parent=1 // pred_check
      _
    $region19: #{tpu_custom_call.1} parent=1 // pred_check_branch
      %39 = sbr.rel (0) target = $region21
    $region20: #{tpu_custom_call.1} parent=1 // pred_region
      %40 = dma.done [#allocation6], 1024
    $region21: #{tpu_custom_call.1} parent=1 // pred_fallthru
      _
    %v41 = vld [vmem:[#allocation2] sm:$0xff]
    %v42 = vld [vmem:[#allocation5] sm:$0xff]
    %v43 = vld [vmem:[#allocation5 + $0x8] sm:$0xff]
    %v44 = vld [vmem:[#allocation5 + $0x10] sm:$0xff]
    %v45 = vld [vmem:[#allocation5 + $0x18] sm:$0xff]
    %v46 = vld [vmem:[#allocation5 + $0x20] sm:$0xff]
    %v47 = vld [vmem:[#allocation5 + $0x28] sm:$0xff]
    %v48 = vld [vmem:[#allocation5 + $0x30] sm:$0xff]
    %v49 = vld [vmem:[#allocation5 + $0x38] sm:$0xff]
    %v50 = vld [vmem:[%s2] sm:$0x1]
    %v52 = vlaneseq
    %v53 = vshrl.u32 %v52, 7
    %v54 = vsub.s32 0, %v53
    %v55 = vrot.slane %v50, %v54
    %vm57 = vcmask 523264
    %v59 = vsel %vm57, %v41, 0
    %61 = vmatprep.subr.mxu0 0.0
    %62 = vmatpush1.msra.mxu0 %v42
    %63 = vmatprep.subr.mxu0 0.0
    %64 = vmatpush1.msra.mxu0 %v43
    %65 = vmatprep.subr.mxu0 0.0
    %66 = vmatpush1.msra.mxu0 %v44
    %67 = vmatprep.subr.mxu0 0.0
    %68 = vmatpush1.msra.mxu0 %v45
    %69 = vmatprep.subr.mxu0 0.0
    %70 = vmatpush1.msra.mxu0 %v46
    %71 = vmatprep.subr.mxu0 0.0
    %72 = vmatpush1.msra.mxu0 %v47
    %73 = vmatprep.subr.mxu0 0.0
    %74 = vmatpush1.msra.mxu0 %v48
    %75 = vmatprep.subr.mxu0 0.0
    %76 = vmatpush1.msra.mxu0 %v49
    %77 = vmatprep.subr.mxu0 0.0
    %78 = vmatpush1.msra.mxu0 0.0
    %79 = vmatprep.subr.mxu0 0.0
    %80 = vmatpush1.msra.mxu0 0.0
    %81 = vmatprep.subr.mxu0 0.0
    %82 = vmatpush1.msra.mxu0 0.0
    %83 = vmatprep.subr.mxu0 0.0
    %84 = vmatpush1.msra.mxu0 0.0
    %85 = vmatprep.subr.mxu0 0.0
    %86 = vmatpush1.msra.mxu0 0.0
    %87 = vmatprep.subr.mxu0 0.0
    %88 = vmatpush1.msra.mxu0 0.0
    %89 = vmatprep.subr.mxu0 0.0
    %90 = vmatpush1.msra.mxu0 0.0
    %91 = vmatprep.subr.mxu0 0.0
    %92 = vmatpush1.msra.mxu0 0.0
    %93 = vmatprep.subr.mxu0 0.0
    %94 = vmatpush1.msra.mxu0 0.0
    %95 = vmatprep.subr.mxu0 0.0
    %96 = vmatpush1.msra.mxu0 0.0
    %97 = vmatprep.subr.mxu0 0.0
    %98 = vmatpush1.msra.mxu0 0.0
    %99 = vmatprep.subr.mxu0 0.0
    %100 = vmatpush1.msra.mxu0 0.0
    %101 = vmatprep.subr.mxu0 0.0
    %102 = vmatpush1.msra.mxu0 0.0
    %103 = vmatprep.subr.mxu0 0.0
    %104 = vmatpush1.msra.mxu0 0.0
    %105 = vmatprep.subr.mxu0 0.0
    %106 = vmatpush1.msra.mxu0 0.0
    %107 = vmatprep.subr.mxu0 0.0
    %108 = vmatpush1.msra.mxu0 0.0
    %109 = vmatprep.subr.mxu0 0.0
    %110 = vmatpush1.msra.mxu0 0.0
    %111 = vmatprep.subr.mxu0 0.0
    %112 = vmatpush1.msra.mxu0 0.0
    %113 = vmatprep.subr.mxu0 0.0
    %114 = vmatpush1.msra.mxu0 0.0
    %115 = vmatprep.subr.mxu0 0.0
    %116 = vmatpush1.msra.mxu0 0.0
    %117 = vmatprep.subr.mxu0 0.0
    %118 = vmatpush1.msra.mxu0 0.0
    %119 = vmatprep.subr.mxu0 0.0
    %120 = vmatpush1.msra.mxu0 0.0
    %121 = vmatprep.subr.mxu0 0.0
    %122 = vmatpush1.msra.mxu0 0.0
    %123 = vmatprep.subr.mxu0 0.0
    %124 = vmatpush1.msra.mxu0 0.0
    %125 = vmatprep.mubr.f32.mxu0 0.0
    %126 = vmatmul.mubr.f32.gmra.mrb[0].mxu0 %v59
    %v127 = vpop.f32.mrb[0].mxu0
    %v128 = vadd.f32 %v55, %v127
    %v129 = vpop.f32.mrb[0].mxu0
    %130 = vdwg.mxu0
    %v131 = vlaneseq
    %v132 = vand.u32 %v131, 127
    %vm133 = vcmp.lt.s32.totalorder %v132, 4
    %vm134 = vcmp.ge.s32.totalorder %v132, 4
    %vm135 = vcmp.lt.s32.totalorder %v132, 36
    %vm136 = vmand %vm134, %vm135
    %v137 = vsel %vm133, %v128, -inf
    %138 = vmax.xlane.f32.xlu0 %v137
    %v139 = vpop.xlane.xlu0 %138
    %v140 = vsub.f32 %v128, %v139
    %v141 = vmul.f32 %v140, 1.442695
    %v142 = vpow.pop %v141
    %v143 = vsel %vm133, %v142, 0.0
    %144 = vadd.xlane.f32.xlu0 %v143
    %v145 = vpop.xlane.xlu0 %144
    %v146 = vlog2.pop %v145
    %v147 = vmul.f32 %v146, 0.6931472
    %v148 = vsub.f32 %v140, %v147
    %v149 = vtanh.pop %v128
    %v150 = vsel %vm136, %v149, 0.0
    %v151 = vsel %vm133, %v148, %v150
    %152 = vst [vmem:[#allocation7] sm:$0xff] %v151
    // Predicated region
    $region22: #{tpu_custom_call.1} parent=1 // pred_check
      _
    $region23: #{tpu_custom_call.1} parent=1 // pred_check_branch
      %154 = sbr.rel (0) target = $region25
    $region24: #{tpu_custom_call.1} parent=1 // pred_region
      %s156 = ssub.s32 128, 128
      %157 = vsyncadd [#allocation4], %s156
      %s159 = sshll.u32 [#allocation7], 4
      %s160 = int_to_ptr.vmem [resolvable:$true] %s159
      %162 = dma.vmem_to_hbm [thread:$0]  %s160, 128, %s3, [#allocation4]
    $region25: #{tpu_custom_call.1} parent=1 // pred_fallthru
      _
    // Predicated region
    $region26: #{tpu_custom_call.1} parent=1 // pred_check
      _
    $region27: #{tpu_custom_call.1} parent=1 // pred_check_branch
      %164 = sbr.rel (0) target = $region29
    $region28: #{tpu_custom_call.1} parent=1 // pred_region
      %165 = dma.done [#allocation4], 128
    $region29: #{tpu_custom_call.1} parent=1 // pred_fallthru
      _
    %166 = vsyncpa [#allocation3], 1
    %167 = vsyncpa [#allocation6], 1
    %168 = vsyncpa [#allocation4], 1

</llo_original>
